<compile_context>
chip_gen: v6e
topology: v6e:2x2x1
jax: 0.10.0
libtpu: 0.0.40
codegen_flags: <defaults>
</compile_context>

<pallas_src>
import functools

import jax
import jax.numpy as jnp
from jax.experimental import pallas as pl
from jax.experimental.pallas import tpu as pltpu


def _cdiv(a, b):
    return (a + b - 1) // b


def _round_up(a, m):
    return _cdiv(a, m) * m


def _vmem_limit_bytes():
    """Per-generation scoped-VMEM limit."""
    try:
        kind = jax.devices()[0].device_kind.lower()
    except Exception:
        kind = ""
    if "v5" in kind or "v6" in kind:
        return 100 * 1024 * 1024   # 128 MiB physical VMEM on v5e / v6e
    return 48 * 1024 * 1024        # conservative default: v7x has 64 MiB physical


# ---------------------------------------------------------------------------
# Kernel 1: one-shot noisy-weight fusion (runs once per forward call).
#   W_eff = w_mu + w_sigma * (eps_in (x) eps_out)   -> bf16   (d_in, d_out_p)
#   b_eff = b_mu + b_sigma * eps_out                -> f32    (1,    d_out_p)
# The epsilon outer product is formed by broadcast inside VMEM and never
# written to HBM.
# ---------------------------------------------------------------------------
def fuse_weights_kernel(wmu_ref, wsig_ref, eps_in_ref, eps_out_ref,
                        bmu_ref, bsig_ref, w_eff_ref, b_eff_ref):
    w_eps = eps_in_ref[...] * eps_out_ref[...]            # (d_in,1)*(1,tn) broadcast
    w_eff_ref[...] = (wmu_ref[...] + wsig_ref[...] * w_eps).astype(w_eff_ref.dtype)
    b_eff_ref[...] = bmu_ref[...] + bsig_ref[...] * eps_out_ref[...]


# ---------------------------------------------------------------------------
# Kernel 2: batch-streamed matmul + bias.  Per-tile work is one VPU pack
# (f32 -> bf16) of the streamed x tile, the MXU matmul, and the bias add on
# the f32 accumulator.  Weights are VMEM-resident bf16 (single-buffered).
# ---------------------------------------------------------------------------
def noisy_linear_kernel(x_ref, w_ref, b_ref, o_ref):
    x_bf16 = x_ref[...].astype(jnp.bfloat16)   # pack on VPU, hidden under DMA/MXU
    y = jnp.dot(x_bf16, w_ref[...], preferred_element_type=jnp.float32)
    o_ref[...] = y + b_ref[...]


@functools.partial(jax.jit, static_argnames=("out_features",))
def noisy_linear_forward(x, params, out_features):
    """x: (B, in_features) f32 -> y: (B, out_features) f32."""
    w_mu, w_sigma, eps_in, eps_out, b_mu, b_sigma = params
    B, d_in = x.shape
    d_out_p = w_mu.shape[1]                    # padded to a multiple of 128 at init
    vmem_limit = _vmem_limit_bytes()

    # ---- one-shot weight fusion (tiled over d_out only; negligible vs matmul) ----
    tile_n = min(d_out_p, 512)
    w_eff, b_eff = pl.pallas_call(
        fuse_weights_kernel,
        out_shape=(jax.ShapeDtypeStruct((d_in, d_out_p), jnp.bfloat16),
                   jax.ShapeDtypeStruct((1, d_out_p), jnp.float32)),
        grid=(_cdiv(d_out_p, tile_n),),
        in_specs=[
            pl.BlockSpec((d_in, tile_n), lambda j: (0, j)),    # w_mu
            pl.BlockSpec((d_in, tile_n), lambda j: (0, j)),    # w_sigma
            pl.BlockSpec((d_in, 1), lambda j: (0, 0)),         # eps_in (column)
            pl.BlockSpec((1, tile_n), lambda j: (0, j)),       # eps_out (row)
            pl.BlockSpec((1, tile_n), lambda j: (0, j)),       # b_mu
            pl.BlockSpec((1, tile_n), lambda j: (0, j)),       # b_sigma
        ],
        out_specs=(
            pl.BlockSpec((d_in, tile_n), lambda j: (0, j)),
            pl.BlockSpec((1, tile_n), lambda j: (0, j)),
        ),
        compiler_params=pltpu.CompilerParams(
            dimension_semantics=("parallel",),
            vmem_limit_bytes=vmem_limit,
        ),
    )(w_mu, w_sigma, eps_in, eps_out, b_mu, b_sigma)

    # ---- batch tiling: balanced, <= 512 rows, multiple of 8 sublanes, and
    #      >= 2 grid steps when B > 8 so both v7x TensorCores get work ----
    n_tiles = _cdiv(B, 512)
    if n_tiles == 1 and B > 8:
        n_tiles = 2
    tile_b = _round_up(_cdiv(B, n_tiles), 8)
    grid_b = _cdiv(B, tile_b)

    out = pl.pallas_call(
        noisy_linear_kernel,
        out_shape=jax.ShapeDtypeStruct((B, d_out_p), jnp.float32),
        grid=(grid_b,),
        in_specs=[
            # streamed x tiles (f32 in HBM; cast to bf16 inside the kernel)
            pl.BlockSpec((tile_b, d_in), lambda i: (i, 0)),
            # resident bf16 W_eff / f32 b_eff: constant index, single-buffered
            pl.BlockSpec((d_in, d_out_p), lambda i: (0, 0),
                         pipeline_mode=pl.Buffered(1)),
            pl.BlockSpec((1, d_out_p), lambda i: (0, 0),
                         pipeline_mode=pl.Buffered(1)),
        ],
        out_specs=pl.BlockSpec((tile_b, d_out_p), lambda i: (i, 0)),
        compiler_params=pltpu.CompilerParams(
            dimension_semantics=("parallel",),
            vmem_limit_bytes=vmem_limit,
        ),
    )(x, w_eff, b_eff)

    # Drop the lane-padding columns (>= out_features) added at init.
    return out[:, :out_features]


def _scale_noise(key, size):
    # torch: x = randn(size); return x.sign() * x.abs().sqrt()
    x = jax.random.normal(key, (size,), jnp.float32)
    return jnp.sign(x) * jnp.sqrt(jnp.abs(x))


def init_params(key, in_features, out_features, std_init=0.5):
    """Replicates NoisyLinear.reset_parameters() + reset_noise().

    Layout differences vs PyTorch (transparent to the forward result):
      * weights stored transposed: (in_features, out_features)
      * out_features padded up to a multiple of 128 (zero-filled columns) so
        the kernel's output stores are lane-dense; the wrapper slices them off
      * weight_epsilon kept factorized as eps_in (d_in, 1) and eps_out
        (1, d_out_p); the outer product is formed inside the fusion kernel.
    Note: real layers should also use in_features that is a multiple of 128
    (256 on v6e/v7x) for full MXU utilization; small K is correct but slow.
    """
    d_out_p = _round_up(out_features, 128)
    k_wmu, k_bmu, k_ein, k_eout = jax.random.split(key, 4)
    mu_range = 1.0 / jnp.sqrt(jnp.float32(in_features))

    def pad_cols(a):
        return jnp.pad(a, ((0, 0), (0, d_out_p - out_features)))

    w_mu = pad_cols(jax.random.uniform(k_wmu, (in_features, out_features),
                                       jnp.float32, -mu_range, mu_range))
    w_sigma = pad_cols(jnp.full((in_features, out_features),
                                std_init / jnp.sqrt(jnp.float32(in_features)),
                                jnp.float32))
    b_mu = pad_cols(jax.random.uniform(k_bmu, (1, out_features), jnp.float32,
                                       -mu_range, mu_range))
    b_sigma = pad_cols(jnp.full((1, out_features),
                                std_init / jnp.sqrt(jnp.float32(out_features)),
                                jnp.float32))

    eps_in = _scale_noise(k_ein, in_features)[:, None]                 # (d_in, 1)
    eps_out = pad_cols(_scale_noise(k_eout, out_features)[None, :])    # (1, d_out_p)

    return (w_mu, w_sigma, eps_in, eps_out, b_mu, b_sigma)


if __name__ == "__main__":
    batch, in_features, out_features = 2, 16, 32

    key = jax.random.PRNGKey(0)
    k_x, k_p = jax.random.split(key)
    x = jax.random.normal(k_x, (batch, in_features), jnp.float32)
    params = init_params(k_p, in_features, out_features)

    y = noisy_linear_forward(x, params, out_features)
    jax.block_until_ready(y)
    assert y.shape == (batch, out_features), y.shape

    # References (params are stored padded / factorized -> reconstruct).
    w_mu, w_sigma, eps_in, eps_out, b_mu, b_sigma = params
    w_eff = w_mu + w_sigma * (eps_in * eps_out)
    b_eff = b_mu + b_sigma * eps_out

    # Numerics-matched reference (bf16 inputs/weights, f32 accumulation).
    ref_bf16 = (jnp.dot(x.astype(jnp.bfloat16), w_eff.astype(jnp.bfloat16),
                        preferred_element_type=jnp.float32)
                + b_eff)[:, :out_features]
    assert jnp.allclose(y, ref_bf16, atol=2e-3, rtol=2e-3)

    # Loose sanity check against the full-f32 PyTorch-equivalent forward.
    ref_f32 = (x @ w_eff + b_eff)[:, :out_features]
    assert jnp.allclose(y, ref_f32, atol=5e-2, rtol=5e-2)

    print("KERNEL_OK")
</pallas_src>

<mosaic_0001>
module attributes {stable_mosaic.version = 11 : i64} {
  func.func @noisy_linear_kernel(%arg0: i32, %arg1: memref<8x16xf32, #tpu.memory_space<vmem>>, %arg2: memref<16x128xbf16, #tpu.memory_space<vmem>>, %arg3: memref<1x128xf32, #tpu.memory_space<vmem>>, %arg4: memref<8x128xf32, #tpu.memory_space<vmem>>) attributes {dimension_semantics = [#tpu.dimension_semantics<parallel>], iteration_bounds = array<i64: 1>, scalar_prefetch = 0 : i64, scratch_operands = 0 : i64, tpu.core_type = #tpu.core_type<tc>, window_params = [{transform_indices = @transform_0, window_bounds = array<i64: 8, 16>}, {pipeline_mode = #tpu.pipeline_mode<synchronous>, transform_indices = @transform_1, window_bounds = array<i64: 16, 128>}, {pipeline_mode = #tpu.pipeline_mode<synchronous>, transform_indices = @transform_2, window_bounds = array<i64: 1, 128>}, {transform_indices = @transform_3, window_bounds = array<i64: 8, 128>}]} {
    %c0 = arith.constant 0 : index
    %c0_0 = arith.constant 0 : index
    %0 = vector.load %arg1[%c0, %c0_0] : memref<8x16xf32, #tpu.memory_space<vmem>>, vector<8x16xf32>
    %1 = arith.truncf %0 : vector<8x16xf32> to vector<8x16xbf16>
    %c0_1 = arith.constant 0 : index
    %c0_2 = arith.constant 0 : index
    %2 = vector.load %arg2[%c0_1, %c0_2] : memref<16x128xbf16, #tpu.memory_space<vmem>>, vector<16x128xbf16>
    %cst = arith.constant dense<0.000000e+00> : vector<8x128xf32>
    %3 = tpu.matmul %1, %2, %cst {dimension_numbers = #tpu.dot_dimension_numbers<[1], [0], [0], [1], [0, 0, 1, 1], [], []>} : vector<8x16xbf16>, vector<16x128xbf16>, vector<8x128xf32> -> vector<8x128xf32>
    %c0_3 = arith.constant 0 : index
    %c0_4 = arith.constant 0 : index
    %4 = vector.load %arg3[%c0_3, %c0_4] : memref<1x128xf32, #tpu.memory_space<vmem>>, vector<1x128xf32>
    %5 = vector.broadcast %4 : vector<1x128xf32> to vector<8x128xf32>
    %6 = arith.addf %3, %5 : vector<8x128xf32>
    %c0_5 = arith.constant 0 : index
    %c0_6 = arith.constant 0 : index
    %7 = vector.load %arg4[%c0_5, %c0_6] : memref<8x128xf32, #tpu.memory_space<vmem>>, vector<8x128xf32>
    tpu.vector_store %arg4[%c0_5, %c0_6], %6 {strides = array<i32>} : memref<8x128xf32, #tpu.memory_space<vmem>>, vector<8x128xf32>,
    return
  }
  func.func @transform_0(%arg0: i32) -> (i32, i32) {
    %c0_i32 = arith.constant 0 : i32
    %c0_i32_0 = arith.constant 0 : i32
    return %arg0, %c0_i32 : i32, i32
  }
  func.func @transform_1(%arg0: i32) -> (i32, i32) {
    %c0_i32 = arith.constant 0 : i32
    %c0_i32_0 = arith.constant 0 : i32
    %c0_i32_1 = arith.constant 0 : i32
    return %c0_i32, %c0_i32_0 : i32, i32
  }
  func.func @transform_2(%arg0: i32) -> (i32, i32) {
    %c0_i32 = arith.constant 0 : i32
    %c0_i32_0 = arith.constant 0 : i32
    %c0_i32_1 = arith.constant 0 : i32
    return %c0_i32, %c0_i32_0 : i32, i32
  }
  func.func @transform_3(%arg0: i32) -> (i32, i32) {
    %c0_i32 = arith.constant 0 : i32
    %c0_i32_0 = arith.constant 0 : i32
    return %arg0, %c0_i32 : i32, i32
  }
}

module attributes {stable_mosaic.version = 11 : i64} {
  func.func @fuse_weights_kernel(%arg0: i32, %arg1: memref<16x128xf32, #tpu.memory_space<vmem>>, %arg2: memref<16x128xf32, #tpu.memory_space<vmem>>, %arg3: memref<16x1xf32, #tpu.memory_space<vmem>>, %arg4: memref<1x128xf32, #tpu.memory_space<vmem>>, %arg5: memref<1x128xf32, #tpu.memory_space<vmem>>, %arg6: memref<1x128xf32, #tpu.memory_space<vmem>>, %arg7: memref<16x128xbf16, #tpu.memory_space<vmem>>, %arg8: memref<1x128xf32, #tpu.memory_space<vmem>>) attributes {dimension_semantics = [#tpu.dimension_semantics<parallel>], iteration_bounds = array<i64: 1>, scalar_prefetch = 0 : i64, scratch_operands = 0 : i64, tpu.core_type = #tpu.core_type<tc>, window_params = [{transform_indices = @transform_0, window_bounds = array<i64: 16, 128>}, {transform_indices = @transform_1, window_bounds = array<i64: 16, 128>}, {pipeline_mode = #tpu.pipeline_mode<synchronous>, transform_indices = @transform_2, window_bounds = array<i64: 16, 1>}, {transform_indices = @transform_3, window_bounds = array<i64: 1, 128>}, {transform_indices = @transform_4, window_bounds = array<i64: 1, 128>}, {transform_indices = @transform_5, window_bounds = array<i64: 1, 128>}, {transform_indices = @transform_6, window_bounds = array<i64: 16, 128>}, {transform_indices = @transform_7, window_bounds = array<i64: 1, 128>}]} {
    %c0 = arith.constant 0 : index
    %c0_0 = arith.constant 0 : index
    %0 = vector.load %arg3[%c0, %c0_0] : memref<16x1xf32, #tpu.memory_space<vmem>>, vector<16x1xf32>
    %c0_1 = arith.constant 0 : index
    %c0_2 = arith.constant 0 : index
    %1 = vector.load %arg4[%c0_1, %c0_2] : memref<1x128xf32, #tpu.memory_space<vmem>>, vector<1x128xf32>
    %2 = vector.broadcast %0 : vector<16x1xf32> to vector<16x128xf32>
    %3 = vector.broadcast %1 : vector<1x128xf32> to vector<16x128xf32>
    %4 = arith.mulf %2, %3 : vector<16x128xf32>
    %c0_3 = arith.constant 0 : index
    %c0_4 = arith.constant 0 : index
    %5 = vector.load %arg1[%c0_3, %c0_4] : memref<16x128xf32, #tpu.memory_space<vmem>>, vector<16x128xf32>
    %c0_5 = arith.constant 0 : index
    %c0_6 = arith.constant 0 : index
    %6 = vector.load %arg2[%c0_5, %c0_6] : memref<16x128xf32, #tpu.memory_space<vmem>>, vector<16x128xf32>
    %7 = arith.mulf %6, %4 : vector<16x128xf32>
    %8 = arith.addf %5, %7 : vector<16x128xf32>
    %9 = arith.truncf %8 : vector<16x128xf32> to vector<16x128xbf16>
    %c0_7 = arith.constant 0 : index
    %c0_8 = arith.constant 0 : index
    %10 = vector.load %arg7[%c0_7, %c0_8] : memref<16x128xbf16, #tpu.memory_space<vmem>>, vector<16x128xbf16>
    tpu.vector_store %arg7[%c0_7, %c0_8], %9 {strides = array<i32>} : memref<16x128xbf16, #tpu.memory_space<vmem>>, vector<16x128xbf16>,
    %c0_9 = arith.constant 0 : index
    %c0_10 = arith.constant 0 : index
    %11 = vector.load %arg5[%c0_9, %c0_10] : memref<1x128xf32, #tpu.memory_space<vmem>>, vector<1x128xf32>
    %c0_11 = arith.constant 0 : index
    %c0_12 = arith.constant 0 : index
    %12 = vector.load %arg6[%c0_11, %c0_12] : memref<1x128xf32, #tpu.memory_space<vmem>>, vector<1x128xf32>
    %c0_13 = arith.constant 0 : index
    %c0_14 = arith.constant 0 : index
    %13 = vector.load %arg4[%c0_13, %c0_14] : memref<1x128xf32, #tpu.memory_space<vmem>>, vector<1x128xf32>
    %14 = arith.mulf %12, %13 : vector<1x128xf32>
    %15 = arith.addf %11, %14 : vector<1x128xf32>
    %c0_15 = arith.constant 0 : index
    %c0_16 = arith.constant 0 : index
    %16 = vector.load %arg8[%c0_15, %c0_16] : memref<1x128xf32, #tpu.memory_space<vmem>>, vector<1x128xf32>
    tpu.vector_store %arg8[%c0_15, %c0_16], %15 {strides = array<i32>} : memref<1x128xf32, #tpu.memory_space<vmem>>, vector<1x128xf32>,
    return
  }
  func.func @transform_0(%arg0: i32) -> (i32, i32) {
    %c0_i32 = arith.constant 0 : i32
    %c0_i32_0 = arith.constant 0 : i32
    return %c0_i32, %arg0 : i32, i32
  }
  func.func @transform_1(%arg0: i32) -> (i32, i32) {
    %c0_i32 = arith.constant 0 : i32
    %c0_i32_0 = arith.constant 0 : i32
    return %c0_i32, %arg0 : i32, i32
  }
  func.func @transform_2(%arg0: i32) -> (i32, i32) {
    %c0_i32 = arith.constant 0 : i32
    %c0_i32_0 = arith.constant 0 : i32
    %c0_i32_1 = arith.constant 0 : i32
    return %c0_i32, %c0_i32_0 : i32, i32
  }
  func.func @transform_3(%arg0: i32) -> (i32, i32) {
    %c0_i32 = arith.constant 0 : i32
    %c0_i32_0 = arith.constant 0 : i32
    return %c0_i32, %arg0 : i32, i32
  }
  func.func @transform_4(%arg0: i32) -> (i32, i32) {
    %c0_i32 = arith.constant 0 : i32
    %c0_i32_0 = arith.constant 0 : i32
    return %c0_i32, %arg0 : i32, i32
  }
  func.func @transform_5(%arg0: i32) -> (i32, i32) {
    %c0_i32 = arith.constant 0 : i32
    %c0_i32_0 = arith.constant 0 : i32
    return %c0_i32, %arg0 : i32, i32
  }
  func.func @transform_6(%arg0: i32) -> (i32, i32) {
    %c0_i32 = arith.constant 0 : i32
    %c0_i32_0 = arith.constant 0 : i32
    return %c0_i32, %arg0 : i32, i32
  }
  func.func @transform_7(%arg0: i32) -> (i32, i32) {
    %c0_i32 = arith.constant 0 : i32
    %c0_i32_0 = arith.constant 0 : i32
    return %c0_i32, %arg0 : i32, i32
  }
}

</mosaic_0001>

<llo_original>
// kernel: noisy_linear_forward.2
$region0: #{noisy_linear_forward.2}
  #allocation0 [shape = 'u32[]', space=smem, size = 0x4, offset = 0x4, fixed_abs, tag = 'smem constant byte address 0x4 - core index']
  #allocation1 [shape = 'u32[144,128]{1,0:T(1,128)}', space=vmem, size = 0x12000, scoped, tag = 'internal scratch']
  %s0 = inlined_call_operand.vmem [shape: f32[16,128], index: 0, kind: input, shape index: {}]
  %s1 = inlined_call_operand.hbm [shape: f32[16,128], index: 1, kind: input, shape index: {}]
  %s2 = inlined_call_operand.vmem [shape: f32[16,1], index: 2, kind: input, shape index: {}]
  %s3 = inlined_call_operand.vmem [shape: f32[1,128], index: 3, kind: input, shape index: {}]
  %s4 = inlined_call_operand.vmem [shape: f32[1,128], index: 4, kind: input, shape index: {}]
  %s5 = inlined_call_operand.vmem [shape: f32[1,128], index: 5, kind: input, shape index: {}]
  %s6 = inlined_call_operand.vmem [shape: bf16[16,128], index: 6, kind: output, shape index: {0}]
  %s7 = inlined_call_operand.vmem [shape: f32[1,128], index: 7, kind: output, shape index: {1}]
  %8 = xla_tuple %s6, %s7
  %s9 = sld [smem:[#allocation0]]
  $region46: #{noisy_linear_forward.2} parent=0
    _
  %s11 = ssub.s32 1, %s9
  %s12 = scalar_select 0, %s11, %s9
  $region1: #{noisy_linear_forward.2} parent=0
    #allocation2 [shape = 'u8[8192]{0}', space=vmem, size = 0x2000, scoped, tag = 'input window, operand 1, single buffered']
    #allocation3 [shape = 's32[1]{0}', space=sflag, size = 0x4, scoped, tag = 'scoped memory for noisy_linear_forward.2']
    %13 = vsyncpa [#allocation3], 0
    // Predicated region
    $region2: #{noisy_linear_forward.2} parent=1 // pred_check
      _
    $region3: #{noisy_linear_forward.2} parent=1 // pred_check_branch
      %15 = sbr.rel (0) target = $region5
    $region4: #{noisy_linear_forward.2} parent=1 // pred_region
      _
    $region5: #{noisy_linear_forward.2} parent=1 // pred_fallthru
      _
    // Predicated region
    $region6: #{noisy_linear_forward.2} parent=1 // pred_check
      _
    $region7: #{noisy_linear_forward.2} parent=1 // pred_check_branch
      %17 = sbr.rel (0) target = $region9
    $region8: #{noisy_linear_forward.2} parent=1 // pred_region
      %s19 = ssub.s32 256, 256
      %20 = vsyncadd [#allocation3], %s19
      %s21 = sshll.u32 [#allocation2], 4
      %s22 = int_to_ptr.vmem [resolvable:$true] %s21
      %27 = dma.hbm_to_vmem [thread:$0]  %s1, 256, %s22, [#allocation3], 128, 128, 8
    $region9: #{noisy_linear_forward.2} parent=1 // pred_fallthru
      _
    // Predicated region
    $region10: #{noisy_linear_forward.2} parent=1 // pred_check
      _
    $region11: #{noisy_linear_forward.2} parent=1 // pred_check_branch
      %29 = sbr.rel (0) target = $region13
    $region12: #{noisy_linear_forward.2} parent=1 // pred_region
      _
    $region13: #{noisy_linear_forward.2} parent=1 // pred_fallthru
      _
    // Predicated region
    $region14: #{noisy_linear_forward.2} parent=1 // pred_check
      _
    $region15: #{noisy_linear_forward.2} parent=1 // pred_check_branch
      %31 = sbr.rel (0) target = $region17
    $region16: #{noisy_linear_forward.2} parent=1 // pred_region
      _
    $region17: #{noisy_linear_forward.2} parent=1 // pred_fallthru
      _
    // Predicated region
    $region18: #{noisy_linear_forward.2} parent=1 // pred_check
      _
    $region19: #{noisy_linear_forward.2} parent=1 // pred_check_branch
      %33 = sbr.rel (0) target = $region21
    $region20: #{noisy_linear_forward.2} parent=1 // pred_region
      _
    $region21: #{noisy_linear_forward.2} parent=1 // pred_fallthru
      _
    // Predicated region
    $region22: #{noisy_linear_forward.2} parent=1 // pred_check
      _
    $region23: #{noisy_linear_forward.2} parent=1 // pred_check_branch
      %35 = sbr.rel (0) target = $region25
    $region24: #{noisy_linear_forward.2} parent=1 // pred_region
      _
    $region25: #{noisy_linear_forward.2} parent=1 // pred_fallthru
      _
    // Predicated region
    $region26: #{noisy_linear_forward.2} parent=1 // pred_check
      _
    $region27: #{noisy_linear_forward.2} parent=1 // pred_check_branch
      %37 = sbr.rel (0) target = $region29
    $region28: #{noisy_linear_forward.2} parent=1 // pred_region
      %38 = dma.done [#allocation3], 256
    $region29: #{noisy_linear_forward.2} parent=1 // pred_fallthru
      _
    %v39 = vld [vmem:[%s2] sm:$0xff]
    %v40 = vld [vmem:[%s2 + $0x8] sm:$0xff]
    %v41 = vld [vmem:[%s3] sm:$0x1]
    %43 = vset.pattern.permute.xlu0 0
    %44 = vperm.xlu0 %43, %v39
    %v45 = vpop.permute.xlu0 %44
    %48 = vset.pattern.permute.xlu0 0
    %49 = vperm.xlu0 %48, %v40
    %v50 = vpop.permute.xlu0 %49
    %v53 = vlaneseq
    %v54 = vshrl.u32 %v53, 7
    %v55 = vsub.s32 0, %v54
    %v56 = vrot.slane %v41, %v55
    %v58 = vmul.f32 %v45, %v56
    %v59 = vmul.f32 %v50, %v56
    %v60 = vld [vmem:[%s0] sm:$0xff]
    %v61 = vld [vmem:[%s0 + $0x8] sm:$0xff]
    %v62 = vld [vmem:[#allocation2] sm:$0xff]
    %v63 = vld [vmem:[#allocation2 + $0x8] sm:$0xff]
    %v64 = vmul.f32 %v62, %v58
    %v65 = vmul.f32 %v63, %v59
    %v66 = vadd.f32 %v60, %v64
    %v67 = vadd.f32 %v61, %v65
    %v68 = vpack.c.bf16 %v67, %v66
    %v70 = vunpack.c.l.b16 %v68
    %v71 = vunpack.c.h.b16 %v68
    %v72 = vpack.c.b16 %v70, %v70
    %v73 = vpack.c.b16 %v71, %v71
    %76 = vst [vmem:[%s6] sm:$0xf] %v72
    %77 = vst [vmem:[%s6 + $0x4] sm:$0xf] %v73
    %v78 = vld [vmem:[%s4] sm:$0x1]
    %v79 = vld [vmem:[%s5] sm:$0x1]
    %v80 = vld [vmem:[%s3] sm:$0x1]
    %v81 = vmul.f32 %v79, %v80
    %v82 = vadd.f32 %v78, %v81
    %83 = vst [vmem:[%s7] sm:$0x1] %v82
    // Predicated region
    $region30: #{noisy_linear_forward.2} parent=1 // pred_check
      _
    $region31: #{noisy_linear_forward.2} parent=1 // pred_check_branch
      %85 = sbr.rel (0) target = $region33
    $region32: #{noisy_linear_forward.2} parent=1 // pred_region
      _
    $region33: #{noisy_linear_forward.2} parent=1 // pred_fallthru
      _
    // Predicated region
    $region34: #{noisy_linear_forward.2} parent=1 // pred_check
      _
    $region35: #{noisy_linear_forward.2} parent=1 // pred_check_branch
      %87 = sbr.rel (0) target = $region37
    $region36: #{noisy_linear_forward.2} parent=1 // pred_region
      _
    $region37: #{noisy_linear_forward.2} parent=1 // pred_fallthru
      _
    // Predicated region
    $region38: #{noisy_linear_forward.2} parent=1 // pred_check
      _
    $region39: #{noisy_linear_forward.2} parent=1 // pred_check_branch
      %89 = sbr.rel (0) target = $region41
    $region40: #{noisy_linear_forward.2} parent=1 // pred_region
      _
    $region41: #{noisy_linear_forward.2} parent=1 // pred_fallthru
      _
    // Predicated region
    $region42: #{noisy_linear_forward.2} parent=1 // pred_check
      _
    $region43: #{noisy_linear_forward.2} parent=1 // pred_check_branch
      %91 = sbr.rel (0) target = $region45
    $region44: #{noisy_linear_forward.2} parent=1 // pred_region
      _
    $region45: #{noisy_linear_forward.2} parent=1 // pred_fallthru
      _
    %92 = vsyncpa [#allocation3], 1

// kernel: noisy_linear_forward.3
$region0: #{noisy_linear_forward.3}
  #allocation0 [shape = 'u32[]', space=smem, size = 0x4, offset = 0x4, fixed_abs, tag = 'smem constant byte address 0x4 - core index']
  #allocation1 [shape = 'u32[144,128]{1,0:T(1,128)}', space=vmem, size = 0x12000, scoped, tag = 'internal scratch']
  %s0 = inlined_call_operand.vmem [shape: f32[2,16], index: 0, kind: input, shape index: {}]
  %s1 = inlined_call_operand.vmem [shape: bf16[16,128], index: 1, kind: input, shape index: {}]
  %s2 = inlined_call_operand.vmem [shape: f32[1,128], index: 2, kind: input, shape index: {}]
  %s3 = inlined_call_operand.hbm [shape: f32[2,128], index: 3, kind: output, shape index: {}]
  %s4 = sld [smem:[#allocation0]]
  $region22: #{noisy_linear_forward.3} parent=0
    _
  %s6 = ssub.s32 1, %s4
  %s7 = scalar_select 0, %s6, %s4
  $region1: #{noisy_linear_forward.3} parent=0
    #allocation2 [shape = 'u8[4096]{0}', space=vmem, size = 0x1000, scoped, tag = 'output window, operand 0, single buffered']
    #allocation3 [shape = 's32[1]{0}', space=sflag, size = 0x4, scoped, tag = 'scoped memory for noisy_linear_forward.3']
    %8 = vsyncpa [#allocation3], 0
    // Predicated region
    $region2: #{noisy_linear_forward.3} parent=1 // pred_check
      _
    $region3: #{noisy_linear_forward.3} parent=1 // pred_check_branch
      %10 = sbr.rel (0) target = $region5
    $region4: #{noisy_linear_forward.3} parent=1 // pred_region
      _
    $region5: #{noisy_linear_forward.3} parent=1 // pred_fallthru
      _
    // Predicated region
    $region6: #{noisy_linear_forward.3} parent=1 // pred_check
      _
    $region7: #{noisy_linear_forward.3} parent=1 // pred_check_branch
      %12 = sbr.rel (0) target = $region9
    $region8: #{noisy_linear_forward.3} parent=1 // pred_region
      _
    $region9: #{noisy_linear_forward.3} parent=1 // pred_fallthru
      _
    // Predicated region
    $region10: #{noisy_linear_forward.3} parent=1 // pred_check
      _
    $region11: #{noisy_linear_forward.3} parent=1 // pred_check_branch
      %14 = sbr.rel (0) target = $region13
    $region12: #{noisy_linear_forward.3} parent=1 // pred_region
      _
    $region13: #{noisy_linear_forward.3} parent=1 // pred_fallthru
      _
    %v16 = vld [vmem:[%s0] sm:$0xff]
    %v17 = vpack.c.bf16 %v16, %v16
    %v18 = vld [vmem:[%s1] sm:$0xf]
    %v19 = vld [vmem:[%s1 + $0x4] sm:$0xf]
    %v20 = vld [vmem:[%s2] sm:$0x1]
    %v22 = vlaneseq
    %v23 = vshrl.u32 %v22, 7
    %v24 = vsub.s32 0, %v23
    %v25 = vrot.slane %v20, %v24
    %v29 = vunpack.c.l.b16 %v18
    %v30 = vunpack.c.l.b16 %v19
    %v31 = vpack.c.b16 %v30, %v29
    %vm33 = vcmask 130048
    %v35 = vsel %vm33, %v17, 0
    %37 = vmatprep.subr.bf16.mxu0 0
    %38 = vmatpush1.bf16.msra.mxu0 0
    %39 = vmatprep.subr.bf16.mxu0 0
    %40 = vmatpush1.bf16.msra.mxu0 0
    %41 = vmatprep.subr.bf16.mxu0 0
    %42 = vmatpush1.bf16.msra.mxu0 0
    %43 = vmatprep.subr.bf16.mxu0 0
    %44 = vmatpush1.bf16.msra.mxu0 0
    %45 = vmatprep.subr.bf16.mxu0 0
    %46 = vmatpush1.bf16.msra.mxu0 0
    %47 = vmatprep.subr.bf16.mxu0 0
    %48 = vmatpush1.bf16.msra.mxu0 0
    %49 = vmatprep.subr.bf16.mxu0 0
    %50 = vmatpush1.bf16.msra.mxu0 0
    %51 = vmatprep.subr.bf16.mxu0 0
    %52 = vmatpush1.bf16.msra.mxu0 %v31
    %53 = vmatprep.subr.bf16.mxu0 0
    %54 = vmatpush2.bf16.msra.mxu0 0
    %55 = vmatprep.subr.bf16.mxu0 0
    %56 = vmatpush2.bf16.msra.mxu0 0
    %57 = vmatprep.subr.bf16.mxu0 0
    %58 = vmatpush2.bf16.msra.mxu0 0
    %59 = vmatprep.subr.bf16.mxu0 0
    %60 = vmatpush2.bf16.msra.mxu0 0
    %61 = vmatprep.subr.bf16.mxu0 0
    %62 = vmatpush2.bf16.msra.mxu0 0
    %63 = vmatprep.subr.bf16.mxu0 0
    %64 = vmatpush2.bf16.msra.mxu0 0
    %65 = vmatprep.subr.bf16.mxu0 0
    %66 = vmatpush2.bf16.msra.mxu0 0
    %67 = vmatprep.subr.bf16.mxu0 0
    %68 = vmatpush2.bf16.msra.mxu0 0
    %69 = vmatprep.mubr.bf16.mxu0 0
    %70 = vmatmul.mubr.bf16.gmra.mxu0 %v35
    %v71 = vpop.f32.mrf.mxu0
    %v72 = vadd.f32 %v25, %v71
    %v73 = vpop.f32.mrf.mxu0
    %v74 = vpop.f32.mrf.mxu0
    %v75 = vpop.f32.mrf.mxu0
    %76 = vdwg.mxu0
    %77 = vst [vmem:[#allocation2] sm:$0xff] %v72
    // Predicated region
    $region14: #{noisy_linear_forward.3} parent=1 // pred_check
      _
    $region15: #{noisy_linear_forward.3} parent=1 // pred_check_branch
      %79 = sbr.rel (0) target = $region17
    $region16: #{noisy_linear_forward.3} parent=1 // pred_region
      %s81 = ssub.s32 128, 32
      %82 = vsyncadd [#allocation3], %s81
      %s83 = sshll.u32 [#allocation2], 4
      %s84 = int_to_ptr.vmem [resolvable:$true] %s83
      %89 = dma.vmem_to_hbm [thread:$0]  %s84, 32, %s3, [#allocation3], 32, 32, 2
    $region17: #{noisy_linear_forward.3} parent=1 // pred_fallthru
      _
    // Predicated region
    $region18: #{noisy_linear_forward.3} parent=1 // pred_check
      _
    $region19: #{noisy_linear_forward.3} parent=1 // pred_check_branch
      %91 = sbr.rel (0) target = $region21
    $region20: #{noisy_linear_forward.3} parent=1 // pred_region
      %92 = dma.done [#allocation3], 128
    $region21: #{noisy_linear_forward.3} parent=1 // pred_fallthru
      _
    %93 = vsyncpa [#allocation3], 1

</llo_original>
